<compile_context>
chip_gen: v5e
topology: v5e:2x2
jax: 0.10.0
libtpu: 0.0.40
codegen_flags: <defaults>
</compile_context>

<pallas_src>
import functools

import jax
import jax.numpy as jnp
from jax.experimental import pallas as pl
from jax.experimental.pallas import tpu as pltpu

_LANE = 128
_SUBLANE = 8
_MAX_BLOCK_CONCEPTS = 128   # bounds the per-concept lane-broadcast unroll and the ct^2 wp operand


def _round_up(x, m):
    return (x + m - 1) // m * m


# ----------------------------------------------------------------------------------------------
# Kernel: one grid step == one (batch tile) x (block of Ct concepts)
# ----------------------------------------------------------------------------------------------
def _concept_block_kernel(x_ref, w_ref, b_ref, wp_ref, bp_ref, emb_ref, pred_ref, *,
                          block_concepts, emb_size, pred_blocked):
    """
    x_ref   : (TB, F)          VMEM, param_dtype (resident across the inner concept axis)
    w_ref   : (1, F, Ct*2E)    VMEM, param_dtype ([Ct pos halves | Ct neg halves] column layout)
    b_ref   : (1, 1, Ct*2E)    VMEM, f32 (matching bias columns)
    wp_ref  : (Ct*2E, Ct)      VMEM, f32 (block-diagonal concept_prob_predictor weight)
    bp_ref  : (1, 1)           VMEM, f32 (predictor bias)
    emb_ref : (TB, Ct*E)       VMEM, lane-dense block of the (B, C*E) embedding slab
    pred_ref: (1, TB, Ct)      concept-blocked predictions  (pred_blocked=True)
              (TB, Ct)         lane-dense predictions        (pred_blocked=False, Ct % 128 == 0)
    """
    ct, e = block_concepts, emb_size
    half = ct * e

    x = x_ref[...]                                                     # (TB, F)
    w = w_ref[0]                                                       # (F, Ct*2E)

    # All Ct contexts in one MXU pass, f32 accumulation; LeakyReLU (slope 0.01) in f32.
    ctx = jnp.dot(x, w, preferred_element_type=jnp.float32) + b_ref[0]     # (TB, Ct*2E)
    ctx = jnp.where(ctx > 0, ctx, 0.01 * ctx)

    # Per-concept logits on the MXU via the block-diagonal predictor weight (no XLU reduce).
    logits = (jnp.dot(ctx, wp_ref[...], preferred_element_type=jnp.float32)
              + bp_ref[0, 0])                                              # (TB, Ct)
    pred = jax.nn.sigmoid(logits)
    if pred_blocked:
        pred_ref[0] = pred
    else:
        pred_ref[...] = pred

    # Hard select: sigmoid(l) > 0.5  <=>  l > 0.  Broadcast each concept's logit over its E
    # embedding lanes using per-concept lane-broadcasts + one concatenate (VPU/XLU only; this
    # replaces the old quadratic (Ct*2E, Ct*E) matmul and uses the SAME logits as c_pred, so
    # embedding and prediction can never disagree at the decision boundary).
    tb = ctx.shape[0]
    mask_wide = jnp.concatenate(
        [jnp.broadcast_to(logits[:, c:c + 1], (tb, e)) for c in range(ct)], axis=-1)
    emb_ref[...] = jnp.where(mask_wide > 0, ctx[:, :half], ctx[:, half:])


# ----------------------------------------------------------------------------------------------
# VMEM budgeting / block-size selection
# ----------------------------------------------------------------------------------------------
def _vmem_budget_bytes():
    """Per-generation VMEM plan budget: ~75% of physical VMEM (v7x: 64 MiB -> 48 MiB;
    v5e/v6e: 128 MiB -> 96 MiB), leaving headroom for Mosaic internal scratch."""
    cap = 64 << 20                      # assume the smallest generation (v7x) if the query fails
    try:
        cap = int(pltpu.get_tpu_info().vmem_capacity_bytes)
    except Exception:                   # sizing heuristic only; fall back to the safe default
        pass
    return min(cap * 3 // 4, 96 << 20)


def _vmem_plan_bytes(tile_b, in_features, block_concepts, emb_size, param_itemsize):
    """Total double-buffered VMEM plan: x tile, W1 block, b1 block, block-diagonal predictor
    weight, and both output blocks (emb + pred)."""
    ct, e = block_concepts, emb_size
    bn = ct * 2 * e
    return (2 * tile_b * in_features * param_itemsize      # x tile
            + 2 * in_features * bn * param_itemsize        # W1 block
            + 2 * bn * 4                                    # b1 block
            + 2 * bn * ct * 4                               # block-diagonal predictor weight
            + 2 * tile_b * ct * e * 4                       # c_emb output block
            + 2 * tile_b * ct * 4)                          # c_pred output block


def _pick_block_concepts(n_concepts, emb_size, in_features, tile_b, param_itemsize, budget):
    """Largest divisor Ct of C giving lane-dense emb stores (Ct*E % 128 == 0, or Ct == C) whose
    full double-buffered VMEM plan fits `budget`.  Raises instead of silently exceeding it."""
    for ct in range(min(n_concepts, _MAX_BLOCK_CONCEPTS), 0, -1):
        if n_concepts % ct:
            continue
        if (ct * emb_size) % _LANE != 0 and ct != n_concepts:
            continue
        if _vmem_plan_bytes(tile_b, in_features, ct, emb_size, param_itemsize) <= budget:
            return ct
    raise ValueError(
        "No concept block size fits the VMEM budget; reduce max_batch_tile, use a narrower "
        "param_dtype, or pass block_concepts explicitly.")


# ----------------------------------------------------------------------------------------------
# One-off parameter preparation (call ONCE at parameter-load time, not per forward call)
# ----------------------------------------------------------------------------------------------
def prepare_concept_embedding_params(w1, b1, wp, bp, *, emb_size, block_concepts=None,
                                     param_dtype=jnp.bfloat16, max_batch_tile=512):
    """Pre-shuffles parameters into the kernel layout.

    w1: (C, F, 2E)  -- NOTE: pre-transposed vs torch nn.Linear weight (pass weight.transpose(-1,-2))
    b1: (C, 2E); wp: (2E,); bp: scalar.
    Returns a params dict consumed by concept_embedding_forward.
    """
    C, F, two_e = w1.shape
    E = emb_size
    assert two_e == 2 * E, (w1.shape, emb_size)
    assert b1.shape == (C, two_e) and wp.shape == (two_e,), (b1.shape, wp.shape)

    itemsize = jnp.dtype(param_dtype).itemsize
    budget = _vmem_budget_bytes()
    tile_b_budget = max(_SUBLANE, _round_up(max_batch_tile, _SUBLANE))

    if block_concepts is None:
        ct = _pick_block_concepts(C, E, F, tile_b_budget, itemsize, budget)
    else:
        ct = block_concepts
        assert C % ct == 0, (C, ct)
        assert (ct * E) % _LANE == 0 or ct == C, (
            "block_concepts * emb_size must be a multiple of 128 (lane-dense output stores) "
            "unless all concepts fit in a single block")
    n_blk = C // ct
    bn = ct * two_e
    f32 = jnp.float32

    # W1: (C, F, 2E) -> (n_blk, F, [Ct pos halves | Ct neg halves]), concept-major inside.
    w_blk = (jnp.asarray(w1, param_dtype)
             .reshape(n_blk, ct, F, 2, E)
             .transpose(0, 2, 3, 1, 4)
             .reshape(n_blk, F, bn))
    # b1: same column order, pre-tiled per block.
    b_blk = (jnp.asarray(b1, f32)
             .reshape(n_blk, ct, 2, E)
             .transpose(0, 2, 1, 3)
             .reshape(n_blk, 1, bn))
    # Block-diagonal predictor weight: column j holds wp for concept j (pos half above neg half).
    eye = jnp.eye(ct, dtype=f32)
    wp_blk = jnp.concatenate(
        [jnp.kron(eye, jnp.asarray(wp[:E], f32).reshape(E, 1)),
         jnp.kron(eye, jnp.asarray(wp[E:], f32).reshape(E, 1))], axis=0)      # (Ct*2E, Ct)
    bp_r = jnp.asarray(bp, f32).reshape(1, 1)

    return dict(w_blk=w_blk, b_blk=b_blk, wp_blk=wp_blk, bp=bp_r,
                emb_size=E, block_concepts=ct, n_concepts=C, in_features=F,
                param_dtype=jnp.dtype(param_dtype), max_batch_tile=max_batch_tile,
                vmem_budget=budget)


# ----------------------------------------------------------------------------------------------
# Forward
# ----------------------------------------------------------------------------------------------
def concept_embedding_forward(x, params):
    """x: (B, F).  Returns (c_emb: (B, C, E), c_pred: (B, C)) matching the PyTorch module
    forward with c=None, mode='joint', hard=True."""
    w_blk, b_blk, wp_blk, bp = params["w_blk"], params["b_blk"], params["wp_blk"], params["bp"]
    E, ct, C, F = (params["emb_size"], params["block_concepts"],
                   params["n_concepts"], params["in_features"])
    pdt = params["param_dtype"]
    itemsize = jnp.dtype(pdt).itemsize
    n_blk, _, bn = w_blk.shape
    half = ct * E

    B, f_in = x.shape
    assert f_in == F, (x.shape, F)

    # ---- Batch tiling (parallel grid axis; x stays resident across the inner concept axis) ----
    max_tb = max(_SUBLANE, _round_up(params["max_batch_tile"], _SUBLANE))
    B_pad = _round_up(B, _SUBLANE)
    tile_b = B_pad if B_pad <= max_tb else max_tb
    B_pad = _round_up(B_pad, tile_b)
    n_b = B_pad // tile_b
    xp = x if B_pad == B else jnp.pad(x, ((0, B_pad - B), (0, 0)))
    xp = xp.astype(pdt)

    # ---- VMEM plan -> scoped limit (never exceeds ~75% of this generation's physical VMEM) ----
    plan = _vmem_plan_bytes(tile_b, F, ct, E, itemsize)
    budget = params["vmem_budget"]
    if plan > budget:
        raise ValueError(
            f"VMEM plan ({plan} B) exceeds the per-generation budget ({budget} B); "
            "use a smaller block_concepts / max_batch_tile or a narrower param_dtype.")
    vmem_limit = min(budget + (8 << 20), max(32 << 20, plan + (8 << 20)))

    pred_lane_dense = (ct % _LANE == 0)

    # ---- Cost estimate (advisory, lets XLA overlap neighbouring ops) ----
    flops = 2 * B_pad * F * C * 2 * E + 2 * B_pad * C * 2 * E * ct
    bytes_accessed = (w_blk.size * itemsize * n_b + xp.size * itemsize
                      + b_blk.size * 4 + wp_blk.size * 4
                      + B_pad * C * E * 4 + B_pad * C * 4)
    cost = pl.CostEstimate(flops=int(flops), transcendentals=int(B_pad * C),
                           bytes_accessed=int(bytes_accessed))

    in_specs = [
        pl.BlockSpec((tile_b, F), lambda bi, ci: (bi, 0)),        # x tile (resident over ci)
        # If profiling shows exposed W1 DMA at step boundaries, add pipeline_mode=pl.Buffered(3)
        pl.BlockSpec((1, F, bn), lambda bi, ci: (ci, 0, 0)),      # W1 block (streamed)
        pl.BlockSpec((1, 1, bn), lambda bi, ci: (ci, 0, 0)),      # b1 block
        pl.BlockSpec((bn, ct), lambda bi, ci: (0, 0)),            # block-diag predictor weight
        pl.BlockSpec((1, 1), lambda bi, ci: (0, 0)),              # bp
    ]
    out_shape = [jax.ShapeDtypeStruct((B_pad, C * E), jnp.float32)]
    out_specs = [pl.BlockSpec((tile_b, half), lambda bi, ci: (bi, ci))]   # lane-dense emb slab
    if pred_lane_dense:
        out_shape.append(jax.ShapeDtypeStruct((B_pad, C), jnp.float32))
        out_specs.append(pl.BlockSpec((tile_b, ct), lambda bi, ci: (bi, ci)))
    else:
        out_shape.append(jax.ShapeDtypeStruct((n_blk, B_pad, ct), jnp.float32))
        out_specs.append(pl.BlockSpec((1, tile_b, ct), lambda bi, ci: (ci, bi, 0)))

    kernel = functools.partial(_concept_block_kernel, block_concepts=ct, emb_size=E,
                               pred_blocked=not pred_lane_dense)

    emb_flat, pred = pl.pallas_call(
        kernel,
        out_shape=tuple(out_shape),
        grid_spec=pltpu.PrefetchScalarGridSpec(
            num_scalar_prefetch=0,
            grid=(n_b, n_blk),
            in_specs=in_specs,
            out_specs=out_specs,
        ),
        compiler_params=pltpu.CompilerParams(
            dimension_semantics=("parallel", "parallel"),   # batch tiles x concept blocks
            vmem_limit_bytes=int(vmem_limit),
        ),
        cost_estimate=cost,
    )(xp, w_blk, b_blk, wp_blk, bp)

    c_emb = emb_flat[:B].reshape(B, C, E)                    # free reshape (row-major slab)
    if pred_lane_dense:
        c_pred = pred[:B]
    else:
        c_pred = jnp.transpose(pred, (1, 0, 2)).reshape(B_pad, C)[:B]   # tiny re-layout
    return c_emb, c_pred


# ----------------------------------------------------------------------------------------------
# Pure-JAX reference mirroring the PyTorch forward (c=None, joint, hard)
# ----------------------------------------------------------------------------------------------
def _reference_forward(x, w1, b1, wp, bp, *, emb_size):
    emb_list, pred_list = [], []
    C = w1.shape[0]
    for i in range(C):
        ctx = x @ w1[i] + b1[i]
        ctx = jnp.where(ctx > 0, ctx, 0.01 * ctx)
        c_pred = jax.nn.sigmoid(ctx @ wp.reshape(-1, 1) + bp)          # (B, 1)
        pred_list.append(c_pred)
        c_hard = (c_pred > 0.5).astype(ctx.dtype)
        emb = ctx[:, :emb_size] * c_hard + ctx[:, emb_size:] * (1 - c_hard)
        emb_list.append(emb[:, None, :])
    return jnp.concatenate(emb_list, axis=1), jnp.concatenate(pred_list, axis=1)


if __name__ == "__main__":
    # Small, TPU-friendly shapes consistent with the module's Linear layers.
    B = 8
    in_features = 32
    emb_size = 16
    n_concepts = 16   # block_concepts=8 -> grid (1, 2), Ct*2E = 256 lanes, Ct*E = 128 lanes

    key = jax.random.PRNGKey(0)
    kx, kw1, kb1, kwp, kbp = jax.random.split(key, 5)

    x = jax.random.normal(kx, (B, in_features), dtype=jnp.float32)
    # Parameters in the kernel's expected layout (torch nn.Linear weights pre-transposed to (F, 2E)).
    w1 = 0.1 * jax.random.normal(kw1, (n_concepts, in_features, 2 * emb_size), dtype=jnp.float32)
    b1 = 0.1 * jax.random.normal(kb1, (n_concepts, 2 * emb_size), dtype=jnp.float32)
    wp = 0.1 * jax.random.normal(kwp, (2 * emb_size,), dtype=jnp.float32)
    bp = 0.1 * jax.random.normal(kbp, (), dtype=jnp.float32)

    ref_emb, ref_pred = _reference_forward(x, w1, b1, wp, bp, emb_size=emb_size)

    # Exact-precision path (param_dtype=f32) against the pure-JAX reference.
    params_f32 = prepare_concept_embedding_params(
        w1, b1, wp, bp, emb_size=emb_size, block_concepts=8, param_dtype=jnp.float32)
    c_emb, c_pred = concept_embedding_forward(x, params_f32)
    c_emb = jax.block_until_ready(c_emb)
    c_pred = jax.block_until_ready(c_pred)
    assert c_emb.shape == (B, n_concepts, emb_size), c_emb.shape
    assert c_pred.shape == (B, n_concepts), c_pred.shape
    assert jnp.allclose(c_emb, ref_emb, atol=1e-5, rtol=1e-5)
    assert jnp.allclose(c_pred, ref_pred, atol=1e-5, rtol=1e-5)

    # Default path: bf16 x/W1 streaming (halves HBM bytes on the dominant weight stream;
    # MXU accumulation and all post-matmul math stay in f32).
    params_bf16 = prepare_concept_embedding_params(
        w1, b1, wp, bp, emb_size=emb_size, block_concepts=8)        # param_dtype=bfloat16 default
    emb16, pred16 = concept_embedding_forward(x, params_bf16)
    emb16 = jax.block_until_ready(emb16)
    pred16 = jax.block_until_ready(pred16)
    assert jnp.allclose(pred16, ref_pred, atol=5e-2, rtol=5e-2)
    # Embeddings compared only away from the 0.5 decision boundary: bf16 rounding can
    # legitimately flip the hard threshold for borderline probabilities.
    safe = jnp.abs(ref_pred - 0.5) > 0.1
    assert jnp.allclose(jnp.where(safe[..., None], emb16, ref_emb), ref_emb,
                        atol=5e-2, rtol=5e-2)

    print("KERNEL_OK")
</pallas_src>

<mosaic_0001>
module attributes {stable_mosaic.version = 11 : i64} {
  func.func @_concept_block_kernel(%arg0: i32, %arg1: i32, %arg2: memref<8x32xf32, #tpu.memory_space<vmem>>, %arg3: memref<1x32x256xf32, #tpu.memory_space<vmem>>, %arg4: memref<1x1x256xf32, #tpu.memory_space<vmem>>, %arg5: memref<256x8xf32, #tpu.memory_space<vmem>>, %arg6: memref<1x1xf32, #tpu.memory_space<vmem>>, %arg7: memref<8x128xf32, #tpu.memory_space<vmem>>, %arg8: memref<1x8x8xf32, #tpu.memory_space<vmem>>) attributes {dimension_semantics = [#tpu.dimension_semantics<parallel>, #tpu.dimension_semantics<parallel>], iteration_bounds = array<i64: 1, 2>, scalar_prefetch = 0 : i64, scratch_operands = 0 : i64, tpu.core_type = #tpu.core_type<tc>, window_params = [{transform_indices = @transform_0, window_bounds = array<i64: 8, 32>}, {transform_indices = @transform_1, window_bounds = array<i64: 1, 32, 256>}, {transform_indices = @transform_2, window_bounds = array<i64: 1, 1, 256>}, {pipeline_mode = #tpu.pipeline_mode<synchronous>, transform_indices = @transform_3, window_bounds = array<i64: 256, 8>}, {pipeline_mode = #tpu.pipeline_mode<synchronous>, transform_indices = @transform_4, window_bounds = array<i64: 1, 1>}, {transform_indices = @transform_5, window_bounds = array<i64: 8, 128>}, {transform_indices = @transform_6, window_bounds = array<i64: 1, 8, 8>}]} {
    %c0 = arith.constant 0 : index
    %c0_0 = arith.constant 0 : index
    %0 = vector.load %arg2[%c0, %c0_0] : memref<8x32xf32, #tpu.memory_space<vmem>>, vector<8x32xf32>
    %c0_1 = arith.constant 0 : index
    %c0_2 = arith.constant 0 : index
    %c0_3 = arith.constant 0 : index
    %1 = vector.load %arg3[%c0_1, %c0_2, %c0_3] : memref<1x32x256xf32, #tpu.memory_space<vmem>>, vector<1x32x256xf32>
    %2 = vector.shape_cast %1 : vector<1x32x256xf32> to vector<32x256xf32>
    %cst = arith.constant dense<0.000000e+00> : vector<8x256xf32>
    %3 = tpu.matmul %0, %2, %cst {dimension_numbers = #tpu.dot_dimension_numbers<[1], [0], [0], [1], [0, 0, 1, 1], [], []>} : vector<8x32xf32>, vector<32x256xf32>, vector<8x256xf32> -> vector<8x256xf32>
    %c0_4 = arith.constant 0 : index
    %c0_5 = arith.constant 0 : index
    %c0_6 = arith.constant 0 : index
    %4 = vector.load %arg4[%c0_4, %c0_5, %c0_6] : memref<1x1x256xf32, #tpu.memory_space<vmem>>, vector<1x1x256xf32>
    %5 = vector.shape_cast %4 : vector<1x1x256xf32> to vector<1x256xf32>
    %6 = vector.broadcast %5 : vector<1x256xf32> to vector<8x256xf32>
    %7 = arith.addf %3, %6 : vector<8x256xf32>
    %cst_7 = arith.constant 0.000000e+00 : f32
    %8 = vector.broadcast %cst_7 : f32 to vector<8x256xf32>
    %9 = arith.cmpf ogt, %7, %8 : vector<8x256xf32>
    %cst_8 = arith.constant 0.00999999977 : f32
    %10 = vector.broadcast %cst_8 : f32 to vector<8x256xf32>
    %11 = arith.mulf %10, %7 : vector<8x256xf32>
    %12 = arith.select %9, %7, %11 : vector<8x256xi1>, vector<8x256xf32>
    %c0_9 = arith.constant 0 : index
    %c0_10 = arith.constant 0 : index
    %13 = vector.load %arg5[%c0_9, %c0_10] : memref<256x8xf32, #tpu.memory_space<vmem>>, vector<256x8xf32>
    %cst_11 = arith.constant dense<0.000000e+00> : vector<8x8xf32>
    %14 = tpu.matmul %12, %13, %cst_11 {dimension_numbers = #tpu.dot_dimension_numbers<[1], [0], [0], [1], [0, 0, 1, 1], [], []>} : vector<8x256xf32>, vector<256x8xf32>, vector<8x8xf32> -> vector<8x8xf32>
    %c0_12 = arith.constant 0 : index
    %c0_13 = arith.constant 0 : index
    %15 = vector.load %arg6[%c0_12, %c0_13] : memref<1x1xf32, #tpu.memory_space<vmem>>, vector<1x1xf32>
    %16 = vector.extract %15[0, 0] : f32 from vector<1x1xf32>
    %17 = vector.broadcast %16 : f32 to vector<8x8xf32>
    %18 = arith.addf %14, %17 : vector<8x8xf32>
    %19 = arith.negf %18 : vector<8x8xf32>
    %20 = math.exp %19 : vector<8x8xf32>
    %cst_14 = arith.constant 1.000000e+00 : f32
    %21 = vector.broadcast %cst_14 : f32 to vector<8x8xf32>
    %22 = arith.addf %21, %20 : vector<8x8xf32>
    %23 = arith.divf %21, %22 : vector<8x8xf32>
    %c0_15 = arith.constant 0 : index
    %c0_16 = arith.constant 0 : index
    %c0_17 = arith.constant 0 : index
    %24 = vector.load %arg8[%c0_15, %c0_16, %c0_17] : memref<1x8x8xf32, #tpu.memory_space<vmem>>, vector<1x8x8xf32>
    %25 = vector.shape_cast %24 : vector<1x8x8xf32> to vector<8x8xf32>
    %26 = vector.shape_cast %23 : vector<8x8xf32> to vector<1x8x8xf32>
    tpu.vector_store %arg8[%c0_15, %c0_16, %c0_17], %26 {strides = array<i32>} : memref<1x8x8xf32, #tpu.memory_space<vmem>>, vector<1x8x8xf32>,
    %27 = vector.extract_strided_slice %18 {offsets = [0, 0], sizes = [8, 1], strides = [1, 1]} : vector<8x8xf32> to vector<8x1xf32>
    %28 = vector.shape_cast %27 : vector<8x1xf32> to vector<8x1xf32>
    %29 = vector.broadcast %28 : vector<8x1xf32> to vector<8x16xf32>
    %30 = vector.extract_strided_slice %18 {offsets = [0, 1], sizes = [8, 1], strides = [1, 1]} : vector<8x8xf32> to vector<8x1xf32>
    %31 = vector.shape_cast %30 : vector<8x1xf32> to vector<8x1xf32>
    %32 = vector.broadcast %31 : vector<8x1xf32> to vector<8x16xf32>
    %33 = vector.extract_strided_slice %18 {offsets = [0, 2], sizes = [8, 1], strides = [1, 1]} : vector<8x8xf32> to vector<8x1xf32>
    %34 = vector.shape_cast %33 : vector<8x1xf32> to vector<8x1xf32>
    %35 = vector.broadcast %34 : vector<8x1xf32> to vector<8x16xf32>
    %36 = vector.extract_strided_slice %18 {offsets = [0, 3], sizes = [8, 1], strides = [1, 1]} : vector<8x8xf32> to vector<8x1xf32>
    %37 = vector.shape_cast %36 : vector<8x1xf32> to vector<8x1xf32>
    %38 = vector.broadcast %37 : vector<8x1xf32> to vector<8x16xf32>
    %39 = vector.extract_strided_slice %18 {offsets = [0, 4], sizes = [8, 1], strides = [1, 1]} : vector<8x8xf32> to vector<8x1xf32>
    %40 = vector.shape_cast %39 : vector<8x1xf32> to vector<8x1xf32>
    %41 = vector.broadcast %40 : vector<8x1xf32> to vector<8x16xf32>
    %42 = vector.extract_strided_slice %18 {offsets = [0, 5], sizes = [8, 1], strides = [1, 1]} : vector<8x8xf32> to vector<8x1xf32>
    %43 = vector.shape_cast %42 : vector<8x1xf32> to vector<8x1xf32>
    %44 = vector.broadcast %43 : vector<8x1xf32> to vector<8x16xf32>
    %45 = vector.extract_strided_slice %18 {offsets = [0, 6], sizes = [8, 1], strides = [1, 1]} : vector<8x8xf32> to vector<8x1xf32>
    %46 = vector.shape_cast %45 : vector<8x1xf32> to vector<8x1xf32>
    %47 = vector.broadcast %46 : vector<8x1xf32> to vector<8x16xf32>
    %48 = vector.extract_strided_slice %18 {offsets = [0, 7], sizes = [8, 1], strides = [1, 1]} : vector<8x8xf32> to vector<8x1xf32>
    %49 = vector.shape_cast %48 : vector<8x1xf32> to vector<8x1xf32>
    %50 = vector.broadcast %49 : vector<8x1xf32> to vector<8x16xf32>
    %51 = tpu.concatenate %29, %32, %35, %38, %41, %44, %47, %50 in 1 : vector<8x16xf32>, vector<8x16xf32>, vector<8x16xf32>, vector<8x16xf32>, vector<8x16xf32>, vector<8x16xf32>, vector<8x16xf32>, vector<8x16xf32> -> vector<8x128xf32>
    %cst_18 = arith.constant 0.000000e+00 : f32
    %52 = vector.broadcast %cst_18 : f32 to vector<8x128xf32>
    %53 = arith.cmpf ogt, %51, %52 : vector<8x128xf32>
    %54 = vector.extract_strided_slice %12 {offsets = [0, 0], sizes = [8, 128], strides = [1, 1]} : vector<8x256xf32> to vector<8x128xf32>
    %55 = vector.extract_strided_slice %12 {offsets = [0, 128], sizes = [8, 128], strides = [1, 1]} : vector<8x256xf32> to vector<8x128xf32>
    %56 = arith.select %53, %54, %55 : vector<8x128xi1>, vector<8x128xf32>
    %c0_19 = arith.constant 0 : index
    %c0_20 = arith.constant 0 : index
    %57 = vector.load %arg7[%c0_19, %c0_20] : memref<8x128xf32, #tpu.memory_space<vmem>>, vector<8x128xf32>
    tpu.vector_store %arg7[%c0_19, %c0_20], %56 {strides = array<i32>} : memref<8x128xf32, #tpu.memory_space<vmem>>, vector<8x128xf32>,
    return
  }
  func.func @transform_0(%arg0: i32, %arg1: i32) -> (i32, i32) {
    %c0_i32 = arith.constant 0 : i32
    %c0_i32_0 = arith.constant 0 : i32
    return %arg0, %c0_i32 : i32, i32
  }
  func.func @transform_1(%arg0: i32, %arg1: i32) -> (i32, i32, i32) {
    %c0_i32 = arith.constant 0 : i32
    %c0_i32_0 = arith.constant 0 : i32
    %c0_i32_1 = arith.constant 0 : i32
    return %arg1, %c0_i32, %c0_i32_0 : i32, i32, i32
  }
  func.func @transform_2(%arg0: i32, %arg1: i32) -> (i32, i32, i32) {
    %c0_i32 = arith.constant 0 : i32
    %c0_i32_0 = arith.constant 0 : i32
    %c0_i32_1 = arith.constant 0 : i32
    return %arg1, %c0_i32, %c0_i32_0 : i32, i32, i32
  }
  func.func @transform_3(%arg0: i32, %arg1: i32) -> (i32, i32) {
    %c0_i32 = arith.constant 0 : i32
    %c0_i32_0 = arith.constant 0 : i32
    %c0_i32_1 = arith.constant 0 : i32
    return %c0_i32, %c0_i32_0 : i32, i32
  }
  func.func @transform_4(%arg0: i32, %arg1: i32) -> (i32, i32) {
    %c0_i32 = arith.constant 0 : i32
    %c0_i32_0 = arith.constant 0 : i32
    %c0_i32_1 = arith.constant 0 : i32
    return %c0_i32, %c0_i32_0 : i32, i32
  }
  func.func @transform_5(%arg0: i32, %arg1: i32) -> (i32, i32) {
    %c0_i32 = arith.constant 0 : i32
    return %arg0, %arg1 : i32, i32
  }
  func.func @transform_6(%arg0: i32, %arg1: i32) -> (i32, i32, i32) {
    %c0_i32 = arith.constant 0 : i32
    %c0_i32_0 = arith.constant 0 : i32
    return %arg1, %arg0, %c0_i32 : i32, i32, i32
  }
}

</mosaic_0001>

<llo_original>
// kernel: tpu_custom_call.1
$region0: #{tpu_custom_call.1}
  #allocation0 [shape = 'u32[]', space=smem, size = 0x4, offset = 0x4, fixed_abs, tag = 'smem constant byte address 0x4 - core index']
  #allocation1 [shape = 'u32[72,128]{1,0:T(1,128)}', space=vmem, size = 0x9000, scoped, tag = 'internal scratch']
  #allocation2 [shape = 'f32[1,1]{1,0:T(1,128)S(1)}', space=vmem, size = 0x200, scoped, tag = 'scoped memory for tpu_custom_call.1']
  %s0 = inlined_call_operand.vmem [shape: f32[8,32], index: 0, kind: input, shape index: {}]
  %s1 = inlined_call_operand.vmem [shape: f32[2,32,256], index: 1, kind: input, shape index: {}]
  %s2 = inlined_call_operand.vmem [shape: f32[2,1,256], index: 2, kind: input, shape index: {}]
  %s3 = inlined_call_operand.vmem [shape: f32[256,8], index: 3, kind: input, shape index: {}]
  %s4 = inlined_call_operand.<no memory space> [shape: f32[1,1], index: 4, kind: input, shape index: {}]
  %s5 = inlined_call_operand.hbm [shape: f32[8,256], index: 5, kind: output, shape index: {0}]
  %s6 = inlined_call_operand.hbm [shape: f32[2,8,8], index: 6, kind: output, shape index: {1}]
  %7 = xla_tuple %s5, %s6
  %s8 = sld [smem:[#allocation0]]
  $region61: #{tpu_custom_call.1} parent=0
    _
  %s10 = ssub.s32 1, %s8
  %s11 = scalar_select 0, %s10, %s8
  %v12 = vstv %s4
  %13 = vst [vmem:[#allocation2] sm:$0x1] %v12
  $region1: #{tpu_custom_call.1} parent=0
    #allocation3 [shape = 'u8[8192]{0}', space=vmem, size = 0x2000, scoped, tag = 'output window, operand 0']
    #allocation4 [shape = 's32[2]{0}', space=sflag, size = 0x8, scoped, tag = 'scoped memory for tpu_custom_call.1']
    #allocation5 [shape = 'u8[8192]{0}', space=vmem, size = 0x2000, scoped, tag = 'output window, operand 1']
    #allocation6 [shape = 's32[2]{0}', space=sflag, size = 0x8, scoped, tag = 'scoped memory for tpu_custom_call.1']
    %14 = vsyncpa [#allocation4], 0
    %s15 = scalar_lea.sflag [#allocation4], 1
    %16 = vsyncpa %s15, 0
    %17 = vsyncpa [#allocation6], 0
    %s18 = scalar_lea.sflag [#allocation6], 1
    %19 = vsyncpa %s18, 0
    loop: start=0, step=1, limit=4
    $region2: #{tpu_custom_call.1} parent=1 // loop_pre_header
      _
    $region3: #{tpu_custom_call.1} parent=1 // loop_header
      %s21 = sphi 0, %s25
      %p22 = scmp.ge.s32.totalorder %s21, 4
      %s28 = sphi 0, %s40
      %s29 = sphi 0, %s36
      %s30 = sphi 0, %s28
      %s31 = sphi 0, %s29
      %s32 = sphi 0, %s30
      %s33 = sphi 0, %s31
      %s43 = sphi 0, %s45
      %s46 = sphi 0, %s43
      %s47 = sphi 0, %s46
      %s63 = sphi 0, %s47
      %s69 = sphi 0, %s71
      %s72 = sphi 0, %s69
      %s73 = sphi 0, %s72
      %s89 = sphi 0, %s73
      %s95 = sphi 0, %s97
      %s98 = sphi 0, %s95
      %s99 = sphi 0, %s98
      %s115 = sphi 0, %s99
      %s119 = sphi 0, %s119
      %s121 = sphi 0, %s119
      %s122 = sphi 0, %s121
      %s136 = sphi 0, %s122
      %s140 = sphi 0, %s140
      %s142 = sphi 0, %s140
      %s143 = sphi 0, %s142
      %s157 = sphi 0, %s143
      %s165 = sphi 0, %s167
      %s168 = sphi 0, %s165
      %s169 = sphi 0, %s168
      %s185 = sphi 0, %s169
      %s193 = sphi 0, %s195
      %s196 = sphi 0, %s193
      %s197 = sphi 0, %s196
      %s213 = sphi 0, %s197
    $region4: #{tpu_custom_call.1} parent=1 // loop_header_branch
      %24 = sbr.rel (%p22) target = $region8
    $region5: #{tpu_custom_call.1} parent=1 // loop_body
      %s26 = ssub.s32 %s21, 1
      %s27 = ssub.s32 %s21, 2
      %s34 = sadd.s32 1, %s29
      %p35 = scmp.ge.s32.totalorder %s34, 2
      %s36 = scalar_select %p35, 0, %s34
      %s37 = sadd.s32 1, %s28
      %s38 = scalar_select %p35, %s37, %s28
      %p39 = scmp.ge.s32.totalorder %s38, 1
      %s40 = scalar_select %p39, 0, %s38
      %s41 = ssub.s32 %s28, %s40
      %p42 = scmp.eq.s32.totalorder %s41, 0
      %s44 = sadd.s32 %s43, 1
      %s45 = scalar_select %p42, %s43, %s44
      %p48 = pneg %p42
      %p49 = scmp.eq.s32.totalorder %s21, 1
      %p50 = por %p48, %p49
      %p51 = scmp.ne.s32.totalorder %s43, %s46
      %p52 = scmp.eq.s32.totalorder %s21, 0
      %p53 = por %p51, %p52
      %p54 = scmp.ne.s32.totalorder %s43, %s46
      %p55 = scmp.eq.s32.totalorder %s26, 1
      %p56 = por %p54, %p55
      %p57 = scmp.ne.s32.totalorder %s46, %s47
      %p58 = scmp.eq.s32.totalorder %s26, 0
      %p59 = por %p57, %p58
      %p60 = scmp.ne.s32.totalorder %s46, %s47
      %p61 = scmp.eq.s32.totalorder %s27, 1
      %p62 = por %p60, %p61
      %p64 = scmp.ne.s32.totalorder %s47, %s63
      %p65 = scmp.eq.s32.totalorder %s27, 0
      %p66 = por %p64, %p65
      %s67 = ssub.s32 %s29, %s36
      %p68 = scmp.eq.s32.totalorder %s67, 0
      %s70 = sadd.s32 %s69, 1
      %s71 = scalar_select %p68, %s69, %s70
      %p74 = pneg %p68
      %p75 = scmp.eq.s32.totalorder %s21, 1
      %p76 = por %p74, %p75
      %p77 = scmp.ne.s32.totalorder %s69, %s72
      %p78 = scmp.eq.s32.totalorder %s21, 0
      %p79 = por %p77, %p78
      %p80 = scmp.ne.s32.totalorder %s69, %s72
      %p81 = scmp.eq.s32.totalorder %s26, 1
      %p82 = por %p80, %p81
      %p83 = scmp.ne.s32.totalorder %s72, %s73
      %p84 = scmp.eq.s32.totalorder %s26, 0
      %p85 = por %p83, %p84
      %p86 = scmp.ne.s32.totalorder %s72, %s73
      %p87 = scmp.eq.s32.totalorder %s27, 1
      %p88 = por %p86, %p87
      %p90 = scmp.ne.s32.totalorder %s73, %s89
      %p91 = scmp.eq.s32.totalorder %s27, 0
      %p92 = por %p90, %p91
      %s93 = ssub.s32 %s29, %s36
      %p94 = scmp.eq.s32.totalorder %s93, 0
      %s96 = sadd.s32 %s95, 1
      %s97 = scalar_select %p94, %s95, %s96
      %p100 = pneg %p94
      %p101 = scmp.eq.s32.totalorder %s21, 1
      %p102 = por %p100, %p101
      %p103 = scmp.ne.s32.totalorder %s95, %s98
      %p104 = scmp.eq.s32.totalorder %s21, 0
      %p105 = por %p103, %p104
      %p106 = scmp.ne.s32.totalorder %s95, %s98
      %p107 = scmp.eq.s32.totalorder %s26, 1
      %p108 = por %p106, %p107
      %p109 = scmp.ne.s32.totalorder %s98, %s99
      %p110 = scmp.eq.s32.totalorder %s26, 0
      %p111 = por %p109, %p110
      %p112 = scmp.ne.s32.totalorder %s98, %s99
      %p113 = scmp.eq.s32.totalorder %s27, 1
      %p114 = por %p112, %p113
      %p116 = scmp.ne.s32.totalorder %s99, %s115
      %p117 = scmp.eq.s32.totalorder %s27, 0
      %p118 = por %p116, %p117
      %s120 = sadd.s32 %s119, 1
      %p123 = scmp.eq.s32.totalorder %s21, 1
      %p124 = scmp.ne.s32.totalorder %s119, %s121
      %p125 = scmp.eq.s32.totalorder %s21, 0
      %p126 = por %p124, %p125
      %p127 = scmp.ne.s32.totalorder %s119, %s121
      %p128 = scmp.eq.s32.totalorder %s26, 1
      %p129 = por %p127, %p128
      %p130 = scmp.ne.s32.totalorder %s121, %s122
      %p131 = scmp.eq.s32.totalorder %s26, 0
      %p132 = por %p130, %p131
      %p133 = scmp.ne.s32.totalorder %s121, %s122
      %p134 = scmp.eq.s32.totalorder %s27, 1
      %p135 = por %p133, %p134
      %p137 = scmp.ne.s32.totalorder %s122, %s136
      %p138 = scmp.eq.s32.totalorder %s27, 0
      %p139 = por %p137, %p138
      %s141 = sadd.s32 %s140, 1
      %p144 = scmp.eq.s32.totalorder %s21, 1
      %p145 = scmp.ne.s32.totalorder %s140, %s142
      %p146 = scmp.eq.s32.totalorder %s21, 0
      %p147 = por %p145, %p146
      %p148 = scmp.ne.s32.totalorder %s140, %s142
      %p149 = scmp.eq.s32.totalorder %s26, 1
      %p150 = por %p148, %p149
      %p151 = scmp.ne.s32.totalorder %s142, %s143
      %p152 = scmp.eq.s32.totalorder %s26, 0
      %p153 = por %p151, %p152
      %p154 = scmp.ne.s32.totalorder %s142, %s143
      %p155 = scmp.eq.s32.totalorder %s27, 1
      %p156 = por %p154, %p155
      %p158 = scmp.ne.s32.totalorder %s143, %s157
      %p159 = scmp.eq.s32.totalorder %s27, 0
      %p160 = por %p158, %p159
      %s161 = ssub.s32 %s28, %s40
      %s162 = ssub.s32 %s29, %s36
      %s163 = sor.u32 %s161, %s162
      %p164 = scmp.eq.s32.totalorder %s163, 0
      %s166 = sadd.s32 %s165, 1
      %s167 = scalar_select %p164, %s165, %s166
      %p170 = pneg %p164
      %p171 = scmp.eq.s32.totalorder %s21, 1
      %p172 = por %p170, %p171
      %p173 = scmp.ne.s32.totalorder %s165, %s168
      %p174 = scmp.eq.s32.totalorder %s21, 0
      %p175 = por %p173, %p174
      %p176 = scmp.ne.s32.totalorder %s165, %s168
      %p177 = scmp.eq.s32.totalorder %s26, 1
      %p178 = por %p176, %p177
      %p179 = scmp.ne.s32.totalorder %s168, %s169
      %p180 = scmp.eq.s32.totalorder %s26, 0
      %p181 = por %p179, %p180
      %p182 = scmp.ne.s32.totalorder %s168, %s169
      %p183 = scmp.eq.s32.totalorder %s27, 1
      %p184 = por %p182, %p183
      %p186 = scmp.ne.s32.totalorder %s169, %s185
      %p187 = scmp.eq.s32.totalorder %s27, 0
      %p188 = por %p186, %p187
      %s189 = ssub.s32 %s29, %s36
      %s190 = ssub.s32 %s28, %s40
      %s191 = sor.u32 %s189, %s190
      %p192 = scmp.eq.s32.totalorder %s191, 0
      %s194 = sadd.s32 %s193, 1
      %s195 = scalar_select %p192, %s193, %s194
      %p198 = pneg %p192
      %p199 = scmp.eq.s32.totalorder %s21, 1
      %p200 = por %p198, %p199
      %p201 = scmp.ne.s32.totalorder %s193, %s196
      %p202 = scmp.eq.s32.totalorder %s21, 0
      %p203 = por %p201, %p202
      %p204 = scmp.ne.s32.totalorder %s193, %s196
      %p205 = scmp.eq.s32.totalorder %s26, 1
      %p206 = por %p204, %p205
      %p207 = scmp.ne.s32.totalorder %s196, %s197
      %p208 = scmp.eq.s32.totalorder %s26, 0
      %p209 = por %p207, %p208
      %p210 = scmp.ne.s32.totalorder %s196, %s197
      %p211 = scmp.eq.s32.totalorder %s27, 1
      %p212 = por %p210, %p211
      %p214 = scmp.ne.s32.totalorder %s197, %s213
      %p215 = scmp.eq.s32.totalorder %s27, 0
      %p216 = por %p214, %p215
      %p217 = scmp.le.s32.totalorder 1, %s21
      %p218 = scmp.lt.s32.totalorder %s21, 3
      %p219 = pnand %p217, %p218
      %p220 = pneg %p219
      // Predicated region
      $region9: #{tpu_custom_call.1} parent=5 // pred_check
        _
      $region10: #{tpu_custom_call.1} parent=5 // pred_check_branch
        %222 = sbr.rel (%p219) target = $region12
      $region11: #{tpu_custom_call.1} parent=5 // pred_region
        %s223 = ssub.s32 %s21, 1
        // Predicated region
        $region13: #{tpu_custom_call.1} parent=11 // pred_check
          %p224 = pneg %p59
        $region14: #{tpu_custom_call.1} parent=11 // pred_check_branch
          %226 = sbr.rel (%p224) target = $region16
        $region15: #{tpu_custom_call.1} parent=11 // pred_region
          %p227 = scmp.lt.s32.totalorder %s30, 0
          %s228 = scalar_select %p227, %s30, 0
          %s229 = smul.addr %s228, 8
          %s230 = scalar_lea.vmem %s0, %s229
        $region16: #{tpu_custom_call.1} parent=11 // pred_fallthru
          _
        // Predicated region
        $region17: #{tpu_custom_call.1} parent=11 // pred_check
          %p231 = pneg %p132
        $region18: #{tpu_custom_call.1} parent=11 // pred_check_branch
          %233 = sbr.rel (%p231) target = $region20
        $region19: #{tpu_custom_call.1} parent=11 // pred_region
          _
        $region20: #{tpu_custom_call.1} parent=11 // pred_fallthru
          _
        // Predicated region
        $region21: #{tpu_custom_call.1} parent=11 // pred_check
          %p234 = pneg %p153
        $region22: #{tpu_custom_call.1} parent=11 // pred_check_branch
          %236 = sbr.rel (%p234) target = $region24
        $region23: #{tpu_custom_call.1} parent=11 // pred_region
          _
        $region24: #{tpu_custom_call.1} parent=11 // pred_fallthru
          _
      $region12: #{tpu_custom_call.1} parent=5 // pred_fallthru
        _
      %p237 = scmp.lt.s32.totalorder %s21, 2
      // Predicated region
      $region25: #{tpu_custom_call.1} parent=5 // pred_check
        %p238 = pneg %p237
      $region26: #{tpu_custom_call.1} parent=5 // pred_check_branch
        %240 = sbr.rel (%p238) target = $region28
      $region27: #{tpu_custom_call.1} parent=5 // pred_region
        // Predicated region
        $region29: #{tpu_custom_call.1} parent=27 // pred_check
          %p241 = pneg %p79
        $region30: #{tpu_custom_call.1} parent=27 // pred_check_branch
          %243 = sbr.rel (%p241) target = $region32
        $region31: #{tpu_custom_call.1} parent=27 // pred_region
          %p244 = scmp.lt.s32.totalorder %s29, 1
          %s245 = scalar_select %p244, %s29, 1
          %s246 = smul.addr %s245, 8
          %s247 = smul.addr %s246, 8
          %s248 = scalar_lea.vmem %s1, %s247
        $region32: #{tpu_custom_call.1} parent=27 // pred_fallthru
          _
        // Predicated region
        $region33: #{tpu_custom_call.1} parent=27 // pred_check
          %p249 = pneg %p105
        $region34: #{tpu_custom_call.1} parent=27 // pred_check_branch
          %251 = sbr.rel (%p249) target = $region36
        $region35: #{tpu_custom_call.1} parent=27 // pred_region
          %p252 = scmp.lt.s32.totalorder %s29, 1
          %s253 = scalar_select %p252, %s29, 1
          %s254 = smul.addr %s253, 2
          %s255 = scalar_lea.vmem %s2, %s254
        $region36: #{tpu_custom_call.1} parent=27 // pred_fallthru
          _
      $region28: #{tpu_custom_call.1} parent=5 // pred_fallthru
        _
      %p256 = scmp.le.s32.totalorder 1, %s21
      %p257 = scmp.lt.s32.totalorder %s21, 3
      %p258 = pnand %p256, %p257
      %p259 = pneg %p258
      // Predicated region
      $region37: #{tpu_custom_call.1} parent=5 // pred_check
        _
      $region38: #{tpu_custom_call.1} parent=5 // pred_check_branch
        %261 = sbr.rel (%p258) target = $region40
      $region39: #{tpu_custom_call.1} parent=5 // pred_region
        %s262 = ssub.s32 %s21, 1
        %p263 = scmp.lt.s32.totalorder %s30, 0
        %s264 = scalar_select %p263, %s30, 0
        %s265 = smul.addr %s264, 8
        %s266 = scalar_lea.vmem %s0, %s265
        %p267 = pneg %p59
        %p268 = pneg %p56
        %p269 = scmp.lt.s32.totalorder %s31, 1
        %s270 = scalar_select %p269, %s31, 1
        %s271 = smul.addr %s270, 8
        %s272 = smul.addr %s271, 8
        %s273 = scalar_lea.vmem %s1, %s272
        %p274 = pneg %p85
        %p275 = pneg %p82
        %p276 = scmp.lt.s32.totalorder %s31, 1
        %s277 = scalar_select %p276, %s31, 1
        %s278 = smul.addr %s277, 2
        %s279 = scalar_lea.vmem %s2, %s278
        %p280 = pneg %p111
        %p281 = pneg %p108
        %p282 = pneg %p132
        %p283 = pneg %p129
        %p284 = pneg %p153
        %p285 = pneg %p150
        %p286 = pneg %p181
        %p287 = pneg %p178
        %s288 = sand.u32 %s168, 1
        %s289 = scalar_lea.sflag [#allocation4], %s288
        %s290 = sand.u32 %s168, 1
        %s291 = smul.addr %s290, 8
        %s292 = scalar_lea.vmem [#allocation3], %s291
        %p293 = pneg %p209
        %p294 = pneg %p206
        %s295 = sand.u32 %s196, 1
        %s296 = scalar_lea.sflag [#allocation6], %s295
        %s297 = sand.u32 %s196, 1
        %s298 = smul.addr %s297, 8
        %s299 = scalar_lea.vmem [#allocation5], %s298
        %p300 = scmp.lt.s32.totalorder %s30, 0
        %s301 = scalar_select %p300, %s30, 0
        %s302 = smul.addr %s301, 8
        %s303 = scalar_lea.vmem %s0, %s302
        %p304 = scmp.lt.s32.totalorder %s31, 1
        %s305 = scalar_select %p304, %s31, 1
        %s306 = smul.addr %s305, 8
        %s307 = smul.addr %s306, 8
        %s308 = scalar_lea.vmem %s1, %s307
        %p309 = scmp.lt.s32.totalorder %s31, 1
        %s310 = scalar_select %p309, %s31, 1
        %s311 = smul.addr %s310, 2
        %s312 = scalar_lea.vmem %s2, %s311
        %v313 = vld [vmem:[%s303] sm:$0xff]
        %v314 = vld [vmem:[%s308] sm:$0xff]
        %v315 = vld [vmem:[%s308 + $0x8] sm:$0xff]
        %v316 = vld [vmem:[%s308 + $0x10] sm:$0xff]
        %v317 = vld [vmem:[%s308 + $0x18] sm:$0xff]
        %v318 = vld [vmem:[%s308 + $0x20] sm:$0xff]
        %v319 = vld [vmem:[%s308 + $0x28] sm:$0xff]
        %v320 = vld [vmem:[%s308 + $0x30] sm:$0xff]
        %v321 = vld [vmem:[%s308 + $0x38] sm:$0xff]
        %v322 = vld [vmem:[%s312] sm:$0x3]
        %v324 = vperm.slane %v322, 0
        %v325 = vperm.slane %v322, 1
        %vm328 = vcmask 261120
        %v330 = vsel %vm328, %v313, 0
        %332 = vmatpush.msra.mxu0 0.0
        %333 = vmatpush.msra.mxu0 0.0
        %334 = vmatpush.msra.mxu0 0.0
        %335 = vmatpush.msra.mxu0 0.0
        %336 = vmatpush.msra.mxu0 0.0
        %337 = vmatpush.msra.mxu0 0.0
        %338 = vmatpush.msra.mxu0 0.0
        %339 = vmatpush.msra.mxu0 0.0
        %340 = vmatpush.msra.mxu0 0.0
        %341 = vmatpush.msra.mxu0 0.0
        %342 = vmatpush.msra.mxu0 0.0
        %343 = vmatpush.msra.mxu0 0.0
        %344 = vmatpush.msra.mxu0 %v320
        %345 = vmatpush.msra.mxu0 %v318
        %346 = vmatpush.msra.mxu0 %v316
        %347 = vmatpush.msra.mxu0 %v314
        %348 = vmatmul.f32.gmra.mxu0 %v330
        %v349 = vpop.f32.mrf.mxu0
        %v350 = vadd.f32 %v324, %v349
        %351 = vdwg.mxu0
        %352 = vmatpush.msra.mxu0 0.0
        %353 = vmatpush.msra.mxu0 0.0
        %354 = vmatpush.msra.mxu0 0.0
        %355 = vmatpush.msra.mxu0 0.0
        %356 = vmatpush.msra.mxu0 0.0
        %357 = vmatpush.msra.mxu0 0.0
        %358 = vmatpush.msra.mxu0 0.0
        %359 = vmatpush.msra.mxu0 0.0
        %360 = vmatpush.msra.mxu0 0.0
        %361 = vmatpush.msra.mxu0 0.0
        %362 = vmatpush.msra.mxu0 0.0
        %363 = vmatpush.msra.mxu0 0.0
        %364 = vmatpush.msra.mxu0 %v321
        %365 = vmatpush.msra.mxu0 %v319
        %366 = vmatpush.msra.mxu0 %v317
        %367 = vmatpush.msra.mxu0 %v315
        %368 = vmatmul.f32.gmra.mxu0 %v330
        %v369 = vpop.f32.mrf.mxu0
        %v370 = vadd.f32 %v325, %v369
        %371 = vdwg.mxu0
        %vm372 = vcmp.gt.f32.partialorder %v350, 0.0
        %vm373 = vcmp.gt.f32.partialorder %v370, 0.0
        %v374 = vmul.f32 %v350, 0.01
        %v375 = vmul.f32 %v370, 0.01
        %v376 = vsel %vm372, %v350, %v374
        %v377 = vsel %vm373, %v370, %v375
        %v378 = vld [vmem:[%s3] sm:$0xff]
        %v379 = vld [vmem:[%s3 + $0x8] sm:$0xff]
        %v380 = vld [vmem:[%s3 + $0x10] sm:$0xff]
        %v381 = vld [vmem:[%s3 + $0x18] sm:$0xff]
        %v382 = vld [vmem:[%s3 + $0x20] sm:$0xff]
        %v383 = vld [vmem:[%s3 + $0x28] sm:$0xff]
        %v384 = vld [vmem:[%s3 + $0x30] sm:$0xff]
        %v385 = vld [vmem:[%s3 + $0x38] sm:$0xff]
        %v386 = vld [vmem:[%s3 + $0x40] sm:$0xff]
        %v387 = vld [vmem:[%s3 + $0x48] sm:$0xff]
        %v388 = vld [vmem:[%s3 + $0x50] sm:$0xff]
        %v389 = vld [vmem:[%s3 + $0x58] sm:$0xff]
        %v390 = vld [vmem:[%s3 + $0x60] sm:$0xff]
        %v391 = vld [vmem:[%s3 + $0x68] sm:$0xff]
        %v392 = vld [vmem:[%s3 + $0x70] sm:$0xff]
        %v393 = vld [vmem:[%s3 + $0x78] sm:$0xff]
        %v394 = vld [vmem:[%s3 + $0x80] sm:$0xff]
        %v395 = vld [vmem:[%s3 + $0x88] sm:$0xff]
        %v396 = vld [vmem:[%s3 + $0x90] sm:$0xff]
        %v397 = vld [vmem:[%s3 + $0x98] sm:$0xff]
        %v398 = vld [vmem:[%s3 + $0xa0] sm:$0xff]
        %v399 = vld [vmem:[%s3 + $0xa8] sm:$0xff]
        %v400 = vld [vmem:[%s3 + $0xb0] sm:$0xff]
        %v401 = vld [vmem:[%s3 + $0xb8] sm:$0xff]
        %v402 = vld [vmem:[%s3 + $0xc0] sm:$0xff]
        %v403 = vld [vmem:[%s3 + $0xc8] sm:$0xff]
        %v404 = vld [vmem:[%s3 + $0xd0] sm:$0xff]
        %v405 = vld [vmem:[%s3 + $0xd8] sm:$0xff]
        %v406 = vld [vmem:[%s3 + $0xe0] sm:$0xff]
        %v407 = vld [vmem:[%s3 + $0xe8] sm:$0xff]
        %v408 = vld [vmem:[%s3 + $0xf0] sm:$0xff]
        %v409 = vld [vmem:[%s3 + $0xf8] sm:$0xff]
        %v410 = vld [vmem:[#allocation2] sm:$0x1]
        %s411 = vtos %v410
        %v412 = vstv %s411
        %413 = vmatpush.msra.mxu0 %v393
        %414 = vmatpush.msra.mxu0 %v392
        %415 = vmatpush.msra.mxu0 %v391
        %416 = vmatpush.msra.mxu0 %v390
        %417 = vmatpush.msra.mxu0 %v389
        %418 = vmatpush.msra.mxu0 %v388
        %419 = vmatpush.msra.mxu0 %v387
        %420 = vmatpush.msra.mxu0 %v386
        %421 = vmatpush.msra.mxu0 %v385
        %422 = vmatpush.msra.mxu0 %v384
        %423 = vmatpush.msra.mxu0 %v383
        %424 = vmatpush.msra.mxu0 %v382
        %425 = vmatpush.msra.mxu0 %v381
        %426 = vmatpush.msra.mxu0 %v380
        %427 = vmatpush.msra.mxu0 %v379
        %428 = vmatpush.msra.mxu0 %v378
        %429 = vmatmul.f32.gmra.mxu0 %v376
        %v430 = vpop.f32.mrf.mxu0
        %v431 = vadd.f32 %v412, %v430
        %432 = vdwg.mxu0
        %433 = vmatpush.msra.mxu0 %v409
        %434 = vmatpush.msra.mxu0 %v408
        %435 = vmatpush.msra.mxu0 %v407
        %436 = vmatpush.msra.mxu0 %v406
        %437 = vmatpush.msra.mxu0 %v405
        %438 = vmatpush.msra.mxu0 %v404
        %439 = vmatpush.msra.mxu0 %v403
        %440 = vmatpush.msra.mxu0 %v402
        %441 = vmatpush.msra.mxu0 %v401
        %442 = vmatpush.msra.mxu0 %v400
        %443 = vmatpush.msra.mxu0 %v399
        %444 = vmatpush.msra.mxu0 %v398
        %445 = vmatpush.msra.mxu0 %v397
        %446 = vmatpush.msra.mxu0 %v396
        %447 = vmatpush.msra.mxu0 %v395
        %448 = vmatpush.msra.mxu0 %v394
        %449 = vmatmul.f32.gmra.mxu0 %v377
        %v450 = vpop.f32.mrf.mxu0
        %v451 = vadd.f32 %v431, %v450
        %452 = vdwg.mxu0
        %v453 = vxor.u32 %v451, 2147483648
        %v454 = vmul.f32 %v453, 1.442695
        %v455 = vpow.pop %v454
        %v456 = vadd.f32 %v455, 1.0
        %v457 = vrcp.pop %v456
        %v458 = vmul.f32 %v456, %v457
        %v459 = vsub.f32 1.0, %v458
        %v460 = vmul.f32 %v457, %v459
        %v461 = vadd.f32 %v457, %v460
        %vm462 = vweird.f32 %v456
        %vm463 = vweird.f32 %v457
        %vm464 = vmor %vm462, %vm463
        %v465 = vsel %vm464, %v457, %v461
        %v466 = vand.u32 2147483647, %v456
        %vm467 = vcmp.eq.f32.partialorder %v466, 8.507059e+37
        %v468 = vand.u32 %v456, 2147483648
        %v469 = vor.u32 1.1754944e-38, %v468
        %v470 = vsel %vm467, %v469, %v465
        %v471 = vmul.f32 1.0, %v470
        %vm472 = vcmask 64512
        %473 = vst.msk [vmem:[%s299] sm:$0xff] %vm472, %v471
        %475 = vset.pattern.permute.xlu0 0
        %476 = vperm.xlu0 %475, %v451
        %v477 = vpop.permute.xlu0 %476
        %479 = vset.pattern.permute.xlu0 1
        %480 = vperm.xlu0 %479, %v451
        %v481 = vpop.permute.xlu0 %480
        %483 = vset.pattern.permute.xlu0 2
        %484 = vperm.xlu0 %483, %v451
        %v485 = vpop.permute.xlu0 %484
        %487 = vset.pattern.permute.xlu0 3
        %488 = vperm.xlu0 %487, %v451
        %v489 = vpop.permute.xlu0 %488
        %491 = vset.pattern.permute.xlu0 4
        %492 = vperm.xlu0 %491, %v451
        %v493 = vpop.permute.xlu0 %492
        %495 = vset.pattern.permute.xlu0 5
        %496 = vperm.xlu0 %495, %v451
        %v497 = vpop.permute.xlu0 %496
        %499 = vset.pattern.permute.xlu0 6
        %500 = vperm.xlu0 %499, %v451
        %v501 = vpop.permute.xlu0 %500
        %503 = vset.pattern.permute.xlu0 7
        %504 = vperm.xlu0 %503, %v451
        %v505 = vpop.permute.xlu0 %504
        %vm507 = vcmask 130048
        %v508 = vsel %vm507, %v477, %v481
        %v509 = vsel %vm328, %v508, %v485
        %vm510 = vcmask 392192
        %v511 = vsel %vm510, %v509, %v489
        %vm512 = vcmask 523264
        %v513 = vsel %vm512, %v511, %v493
        %vm514 = vcmask 654336
        %v515 = vsel %vm514, %v513, %v497
        %vm516 = vcmask 785408
        %v517 = vsel %vm516, %v515, %v501
        %vm518 = vcmask 916480
        %v519 = vsel %vm518, %v517, %v505
        %vm520 = vcmp.gt.f32.partialorder %v519, 0.0
        %v521 = vsel %vm520, %v376, %v377
        %522 = vst [vmem:[%s292] sm:$0xff] %v521
        %s523 = sand.u32 %s168, 1
        %s524 = scalar_lea.sflag [#allocation4], %s523
        %s525 = sand.u32 %s168, 1
        %s526 = smul.addr %s525, 8
        %s527 = scalar_lea.vmem [#allocation3], %s526
        %s528 = sand.u32 %s196, 1
        %s529 = scalar_lea.sflag [#allocation6], %s528
        %s530 = sand.u32 %s196, 1
        %s531 = smul.addr %s530, 8
        %s532 = scalar_lea.vmem [#allocation5], %s531
        // Predicated region
        $region41: #{tpu_custom_call.1} parent=39 // pred_check
          %p533 = pneg %p178
        $region42: #{tpu_custom_call.1} parent=39 // pred_check_branch
          %535 = sbr.rel (%p533) target = $region44
        $region43: #{tpu_custom_call.1} parent=39 // pred_region
          %537 = vsyncadd %s524, 0
          %s538 = smul.addr %s30, 2
          %s539 = sadd.s32 %s31, %s538
          %s540 = smul.addr %s539, 8
          %s541 = scalar_lea.hbm %s5, %s540
          %s543 = sshll.u32 %s527, 4
          %s544 = int_to_ptr.vmem [resolvable:$true] %s543
          %s545 = sshll.u32 %s541, 4
          %s546 = int_to_ptr.hbm [resolvable:$true] %s545
          %548 = dma.vmem_to_hbm [thread:$0]  %s544, 128, %s546, %s524
        $region44: #{tpu_custom_call.1} parent=39 // pred_fallthru
          _
        // Predicated region
        $region45: #{tpu_custom_call.1} parent=39 // pred_check
          %p549 = pneg %p206
        $region46: #{tpu_custom_call.1} parent=39 // pred_check_branch
          %551 = sbr.rel (%p549) target = $region48
        $region47: #{tpu_custom_call.1} parent=39 // pred_region
          %553 = vsyncadd %s529, 0
          %s554 = sadd.s32 %s30, %s31
          %s555 = smul.addr %s554, 8
          %s556 = scalar_lea.hbm %s6, %s555
          %s558 = sshll.u32 %s532, 4
          %s559 = int_to_ptr.vmem [resolvable:$true] %s558
          %s560 = sshll.u32 %s556, 4
          %s561 = int_to_ptr.hbm [resolvable:$true] %s560
          %563 = dma.vmem_to_hbm [thread:$0]  %s559, 128, %s561, %s529
        $region48: #{tpu_custom_call.1} parent=39 // pred_fallthru
          _
      $region40: #{tpu_custom_call.1} parent=5 // pred_fallthru
        _
      %p564 = scmp.le.s32.totalorder 2, %s21
      // Predicated region
      $region49: #{tpu_custom_call.1} parent=5 // pred_check
        %p565 = pneg %p564
      $region50: #{tpu_custom_call.1} parent=5 // pred_check_branch
        %567 = sbr.rel (%p565) target = $region52
      $region51: #{tpu_custom_call.1} parent=5 // pred_region
        %s568 = ssub.s32 %s21, 2
        // Predicated region
        $region53: #{tpu_custom_call.1} parent=51 // pred_check
          %p569 = pneg %p184
        $region54: #{tpu_custom_call.1} parent=51 // pred_check_branch
          %571 = sbr.rel (%p569) target = $region56
        $region55: #{tpu_custom_call.1} parent=51 // pred_region
          %s572 = sand.u32 %s169, 1
          %s573 = scalar_lea.sflag [#allocation4], %s572
          %s574 = sand.u32 %s169, 1
          %s575 = smul.addr %s574, 8
          %s576 = scalar_lea.vmem [#allocation3], %s575
          %578 = dma.done %s573, 128
        $region56: #{tpu_custom_call.1} parent=51 // pred_fallthru
          _
        // Predicated region
        $region57: #{tpu_custom_call.1} parent=51 // pred_check
          %p579 = pneg %p212
        $region58: #{tpu_custom_call.1} parent=51 // pred_check_branch
          %581 = sbr.rel (%p579) target = $region60
        $region59: #{tpu_custom_call.1} parent=51 // pred_region
          %s582 = sand.u32 %s197, 1
          %s583 = scalar_lea.sflag [#allocation6], %s582
          %s584 = sand.u32 %s197, 1
          %s585 = smul.addr %s584, 8
          %s586 = scalar_lea.vmem [#allocation5], %s585
          %588 = dma.done %s583, 128
        $region60: #{tpu_custom_call.1} parent=51 // pred_fallthru
          _
      $region52: #{tpu_custom_call.1} parent=5 // pred_fallthru
        _
    $region6: #{tpu_custom_call.1} parent=1 // loop_footer
      %s25 = sadd.s32 1, %s21
    $region7: #{tpu_custom_call.1} parent=1 // loop_footer_branch
      %20 = sbr.rel target = $region3
    $region8: #{tpu_custom_call.1} parent=1 // loop_exit
      _
    %589 = vsyncpa [#allocation4], 1
    %s590 = scalar_lea.sflag [#allocation4], 1
    %591 = vsyncpa %s590, 1
    %592 = vsyncpa [#allocation6], 1
    %s593 = scalar_lea.sflag [#allocation6], 1
    %594 = vsyncpa %s593, 1

</llo_original>
